<compile_context>
chip_gen: v7x
topology: tpu7x:2x2x1
jax: 0.10.0
libtpu: 0.0.40
codegen_flags: <defaults>
</compile_context>

<pallas_src>
import functools

import jax
import jax.numpy as jnp
from jax.experimental import pallas as pl
from jax.experimental.pallas import tpu as pltpu


# ----------------------------------------------------------------------------
# Pallas kernel: fused BN(affine) -> activation -> 1x1 conv (matmul)
# ----------------------------------------------------------------------------
def _transition_kernel(alpha, x_ref, scale_ref, shift_ref, w_ref, b_ref, o_ref):
    # x_ref block: (1, C, TX); scale/shift: (C, 1); w: (Cout, C); b: (Cout, 1)
    x = x_ref[0]                                        # (C, TX)
    a = x * scale_ref[...] + shift_ref[...]             # folded BatchNorm
    if alpha == 0.0:                                    # static Python branch
        act = jnp.maximum(a, 0.0)                       # ReLU (no extra vmul)
    else:
        act = jnp.where(a > 0, a, alpha * a)            # LeakyReLU
    y = jnp.dot(w_ref[...], act,
                preferred_element_type=jnp.float32)     # 1x1 conv on the MXU
    o_ref[0] = (y + b_ref[...]).astype(o_ref.dtype)


def _round_up(v, m):
    return ((v + m - 1) // m) * m


def _pick_spatial_tile(hw, c, cout, itemsize=4, budget_bytes=24 << 20):
    """Lane-tile (multiple of 128) sized so the working set fits a portable
    VMEM budget: 2x double-buffered x tile + act temp + 2x output tile."""
    per_lane = (3 * c + 2 * cout) * itemsize            # bytes per lane column
    tx = budget_bytes // max(per_lane, 1)
    tx = (tx // 128) * 128
    tx = max(128, min(tx, 2048))                        # roofline sweet spot
    return min(tx, _round_up(hw, 128))                  # don't exceed padded HW


@functools.partial(jax.jit, static_argnames=("alpha",))
def transition_forward(x, scale, shift, w, b, *, alpha):
    """x: (N, C, H, W) f32; scale/shift: (C,1); w: (Cout, C); b: (Cout,1)."""
    N, C, H, W = x.shape
    Cout = w.shape[0]
    HW = H * W
    x2 = x.reshape(N, C, HW)                            # contiguous reshape
    tx = _pick_spatial_tile(HW, C, Cout)
    grid = (N, pl.cdiv(HW, tx))                         # ragged last tile OK

    # Explicit scoped-VMEM limit sized to the tiles (double-buffered in/out,
    # activation temp, weights/affine).  Kept well under v7x's 64 MiB.
    vmem_est = 4 * (2 * C * tx + C * tx + 2 * Cout * tx + Cout * C + 2 * C + Cout)
    vmem_limit = int(min(max(2 * vmem_est, 32 << 20), 64 << 20))

    out = pl.pallas_call(
        functools.partial(_transition_kernel, alpha),
        out_shape=jax.ShapeDtypeStruct((N, Cout, HW), jnp.float32),
        grid=grid,
        in_specs=[
            pl.BlockSpec((1, C, tx), lambda n, t: (n, 0, t)),
            pl.BlockSpec((C, 1), lambda n, t: (0, 0)),
            pl.BlockSpec((C, 1), lambda n, t: (0, 0)),
            pl.BlockSpec((Cout, C), lambda n, t: (0, 0)),
            pl.BlockSpec((Cout, 1), lambda n, t: (0, 0)),
        ],
        out_specs=pl.BlockSpec((1, Cout, tx), lambda n, t: (n, 0, t)),
        compiler_params=pltpu.CompilerParams(
            dimension_semantics=("parallel", "parallel"),
            vmem_limit_bytes=vmem_limit),
    )(x2, scale, shift, w, b)
    return out.reshape(N, Cout, H, W)


# ----------------------------------------------------------------------------
# Module port
# ----------------------------------------------------------------------------
class TransitionLayer:
    """JAX/Pallas port of transitionLayer: BN -> ReLU/LeakyReLU -> 1x1 Conv."""

    def __init__(self, inChannel=64, compressionRate=0.5, activ='ReLU',
                 eps=1e-5, key=None):
        if key is None:
            key = jax.random.PRNGKey(42)
        outChannel = int(inChannel * compressionRate)
        self.eps = eps
        self.alpha = 0.01 if activ == 'LeakyReLU' else 0.0  # PyTorch LeakyReLU default
        # BatchNorm2d parameters / buffers (PyTorch defaults)
        self.gamma = jnp.ones((inChannel,), jnp.float32)
        self.beta = jnp.zeros((inChannel,), jnp.float32)
        self.running_mean = jnp.zeros((inChannel,), jnp.float32)
        self.running_var = jnp.ones((inChannel,), jnp.float32)
        # Conv2d(inChannel, outChannel, kernel_size=1) parameters
        k1, k2 = jax.random.split(key)
        bound = 1.0 / (inChannel ** 0.5)
        self.conv_w = jax.random.uniform(
            k1, (outChannel, inChannel), jnp.float32, -bound, bound)
        self.conv_b = jax.random.uniform(
            k2, (outChannel,), jnp.float32, -bound, bound)

    def __call__(self, x, training=False):
        if training:
            # training-mode BN forward: batch statistics (biased variance).
            # TODO(synk): running-stat (momentum) updates are a training side
            # effect, not part of the forward output; the stats reduction is a
            # separate XLA pass over x (could be fused into a Pallas pre-pass).
            mean = jnp.mean(x, axis=(0, 2, 3))
            var = jnp.var(x, axis=(0, 2, 3))
        else:
            mean = self.running_mean
            var = self.running_var
        scale = self.gamma * jax.lax.rsqrt(var + self.eps)
        shift = self.beta - mean * scale
        return transition_forward(
            x,
            scale.reshape(-1, 1).astype(jnp.float32),
            shift.reshape(-1, 1).astype(jnp.float32),
            self.conv_w,
            self.conv_b.reshape(-1, 1),
            alpha=self.alpha)


# ----------------------------------------------------------------------------
# Pure-JAX reference (for verification only)
# ----------------------------------------------------------------------------
def _forward_ref(layer, x, training=False):
    if training:
        mean = jnp.mean(x, axis=(0, 2, 3))
        var = jnp.var(x, axis=(0, 2, 3))
    else:
        mean, var = layer.running_mean, layer.running_var
    xn = (x - mean[None, :, None, None]) * jax.lax.rsqrt(
        var[None, :, None, None] + layer.eps)
    xn = xn * layer.gamma[None, :, None, None] + layer.beta[None, :, None, None]
    a = jnp.where(xn > 0, xn, layer.alpha * xn)
    y = jnp.einsum('oc,nchw->nohw', layer.conv_w, a,
                   precision=jax.lax.Precision.HIGHEST)
    return y + layer.conv_b[None, :, None, None]


# ----------------------------------------------------------------------------
# Main
# ----------------------------------------------------------------------------
if __name__ == "__main__":
    key = jax.random.PRNGKey(0)
    k1, k2, k3, k4, k5 = jax.random.split(key, 5)

    # --- eval mode, ReLU, non-trivial BN stats/affine -----------------------
    N, C, H, W = 2, 64, 16, 16
    x = jax.random.normal(k1, (N, C, H, W), dtype=jnp.float32)

    layer = TransitionLayer(inChannel=C, compressionRate=0.5, activ='ReLU')
    layer.running_mean = 0.3 * jax.random.normal(k2, (C,), dtype=jnp.float32)
    layer.running_var = jnp.abs(jax.random.normal(k3, (C,), dtype=jnp.float32)) + 0.5
    layer.gamma = 1.0 + 0.2 * jax.random.normal(k4, (C,), dtype=jnp.float32)
    layer.beta = 0.1 * jax.random.normal(k5, (C,), dtype=jnp.float32)

    out = jax.block_until_ready(layer(x, training=False))
    ref = _forward_ref(layer, x, training=False)
    assert out.shape == ref.shape == (N, C // 2, H, W)
    err = jnp.max(jnp.abs(out - ref))
    assert err < 1e-3, f"eval/ReLU max err {err}"

    # --- training mode (batch stats), LeakyReLU -----------------------------
    layer2 = TransitionLayer(inChannel=C, compressionRate=0.5, activ='LeakyReLU',
                             key=jax.random.PRNGKey(7))
    out2 = jax.block_until_ready(layer2(x, training=True))
    ref2 = _forward_ref(layer2, x, training=True)
    assert out2.shape == ref2.shape
    err2 = jnp.max(jnp.abs(out2 - ref2))
    assert err2 < 1e-3, f"train/LeakyReLU max err {err2}"

    # --- ragged spatial extent (HW = 81, not a multiple of 128) -------------
    # Exercises the cdiv grid + masked output store path of the new tiling.
    x3 = jax.random.normal(jax.random.PRNGKey(3), (2, C, 9, 9), dtype=jnp.float32)
    out3 = jax.block_until_ready(layer(x3, training=False))
    ref3 = _forward_ref(layer, x3, training=False)
    assert out3.shape == ref3.shape == (2, C // 2, 9, 9)
    err3 = jnp.max(jnp.abs(out3 - ref3))
    assert err3 < 1e-3, f"ragged-HW max err {err3}"

    print("KERNEL_OK")
</pallas_src>

<mosaic_0001>
module attributes {stable_mosaic.version = 11 : i64} {
  func.func @_transition_kernel(%arg0: i32, %arg1: i32, %arg2: memref<1x64x256xf32, #tpu.memory_space<vmem>>, %arg3: memref<64x1xf32, #tpu.memory_space<vmem>>, %arg4: memref<64x1xf32, #tpu.memory_space<vmem>>, %arg5: memref<32x64xf32, #tpu.memory_space<vmem>>, %arg6: memref<32x1xf32, #tpu.memory_space<vmem>>, %arg7: memref<1x32x256xf32, #tpu.memory_space<vmem>>) attributes {dimension_semantics = [#tpu.dimension_semantics<parallel>, #tpu.dimension_semantics<parallel>], iteration_bounds = array<i64: 2, 1>, scalar_prefetch = 0 : i64, scratch_operands = 0 : i64, tpu.core_type = #tpu.core_type<tc>, window_params = [{transform_indices = @transform_0, window_bounds = array<i64: 1, 64, 256>}, {pipeline_mode = #tpu.pipeline_mode<synchronous>, transform_indices = @transform_1, window_bounds = array<i64: 64, 1>}, {pipeline_mode = #tpu.pipeline_mode<synchronous>, transform_indices = @transform_2, window_bounds = array<i64: 64, 1>}, {pipeline_mode = #tpu.pipeline_mode<synchronous>, transform_indices = @transform_3, window_bounds = array<i64: 32, 64>}, {pipeline_mode = #tpu.pipeline_mode<synchronous>, transform_indices = @transform_4, window_bounds = array<i64: 32, 1>}, {transform_indices = @transform_5, window_bounds = array<i64: 1, 32, 256>}]} {
    %c0 = arith.constant 0 : index
    %c0_0 = arith.constant 0 : index
    %c0_1 = arith.constant 0 : index
    %0 = vector.load %arg2[%c0, %c0_0, %c0_1] : memref<1x64x256xf32, #tpu.memory_space<vmem>>, vector<1x64x256xf32>
    %1 = vector.shape_cast %0 : vector<1x64x256xf32> to vector<64x256xf32>
    %c0_2 = arith.constant 0 : index
    %c0_3 = arith.constant 0 : index
    %2 = vector.load %arg3[%c0_2, %c0_3] : memref<64x1xf32, #tpu.memory_space<vmem>>, vector<64x1xf32>
    %3 = vector.broadcast %2 : vector<64x1xf32> to vector<64x256xf32>
    %4 = arith.mulf %1, %3 : vector<64x256xf32>
    %c0_4 = arith.constant 0 : index
    %c0_5 = arith.constant 0 : index
    %5 = vector.load %arg4[%c0_4, %c0_5] : memref<64x1xf32, #tpu.memory_space<vmem>>, vector<64x1xf32>
    %6 = vector.broadcast %5 : vector<64x1xf32> to vector<64x256xf32>
    %7 = arith.addf %4, %6 : vector<64x256xf32>
    %cst = arith.constant 0.000000e+00 : f32
    %8 = vector.broadcast %cst : f32 to vector<64x256xf32>
    %9 = arith.maximumf %7, %8 : vector<64x256xf32>
    %c0_6 = arith.constant 0 : index
    %c0_7 = arith.constant 0 : index
    %10 = vector.load %arg5[%c0_6, %c0_7] : memref<32x64xf32, #tpu.memory_space<vmem>>, vector<32x64xf32>
    %cst_8 = arith.constant dense<0.000000e+00> : vector<32x256xf32>
    %11 = tpu.matmul %10, %9, %cst_8 {dimension_numbers = #tpu.dot_dimension_numbers<[1], [0], [0], [1], [0, 0, 1, 1], [], []>} : vector<32x64xf32>, vector<64x256xf32>, vector<32x256xf32> -> vector<32x256xf32>
    %c0_9 = arith.constant 0 : index
    %c0_10 = arith.constant 0 : index
    %12 = vector.load %arg6[%c0_9, %c0_10] : memref<32x1xf32, #tpu.memory_space<vmem>>, vector<32x1xf32>
    %13 = vector.broadcast %12 : vector<32x1xf32> to vector<32x256xf32>
    %14 = arith.addf %11, %13 : vector<32x256xf32>
    %c0_11 = arith.constant 0 : index
    %c0_12 = arith.constant 0 : index
    %c0_13 = arith.constant 0 : index
    %15 = vector.load %arg7[%c0_11, %c0_12, %c0_13] : memref<1x32x256xf32, #tpu.memory_space<vmem>>, vector<1x32x256xf32>
    %16 = vector.shape_cast %15 : vector<1x32x256xf32> to vector<32x256xf32>
    %17 = vector.shape_cast %14 : vector<32x256xf32> to vector<1x32x256xf32>
    tpu.vector_store %arg7[%c0_11, %c0_12, %c0_13], %17 {strides = array<i32>} : memref<1x32x256xf32, #tpu.memory_space<vmem>>, vector<1x32x256xf32>,
    return
  }
  func.func @transform_0(%arg0: i32, %arg1: i32) -> (i32, i32, i32) {
    %c0_i32 = arith.constant 0 : i32
    %c0_i32_0 = arith.constant 0 : i32
    return %arg0, %c0_i32, %arg1 : i32, i32, i32
  }
  func.func @transform_1(%arg0: i32, %arg1: i32) -> (i32, i32) {
    %c0_i32 = arith.constant 0 : i32
    %c0_i32_0 = arith.constant 0 : i32
    %c0_i32_1 = arith.constant 0 : i32
    return %c0_i32, %c0_i32_0 : i32, i32
  }
  func.func @transform_2(%arg0: i32, %arg1: i32) -> (i32, i32) {
    %c0_i32 = arith.constant 0 : i32
    %c0_i32_0 = arith.constant 0 : i32
    %c0_i32_1 = arith.constant 0 : i32
    return %c0_i32, %c0_i32_0 : i32, i32
  }
  func.func @transform_3(%arg0: i32, %arg1: i32) -> (i32, i32) {
    %c0_i32 = arith.constant 0 : i32
    %c0_i32_0 = arith.constant 0 : i32
    %c0_i32_1 = arith.constant 0 : i32
    return %c0_i32, %c0_i32_0 : i32, i32
  }
  func.func @transform_4(%arg0: i32, %arg1: i32) -> (i32, i32) {
    %c0_i32 = arith.constant 0 : i32
    %c0_i32_0 = arith.constant 0 : i32
    %c0_i32_1 = arith.constant 0 : i32
    return %c0_i32, %c0_i32_0 : i32, i32
  }
  func.func @transform_5(%arg0: i32, %arg1: i32) -> (i32, i32, i32) {
    %c0_i32 = arith.constant 0 : i32
    %c0_i32_0 = arith.constant 0 : i32
    return %arg0, %c0_i32, %arg1 : i32, i32, i32
  }
}

</mosaic_0001>

<llo_original>
// kernel: transition_forward.1
$region0: #{transition_forward.1}
  #allocation0 [shape = 'u32[]', space=smem, size = 0x4, offset = 0x4, fixed_abs, tag = 'smem constant byte address 0x4 - core index']
  #allocation1 [shape = 'u32[144,128]{1,0:T(1,128)}', space=vmem, size = 0x12000, scoped, tag = 'internal scratch']
  %s0 = inlined_call_operand.vmem [shape: f32[2,64,256], index: 0, kind: input, shape index: {}]
  %s1 = inlined_call_operand.vmem [shape: f32[64,1], index: 1, kind: input, shape index: {}]
  %s2 = inlined_call_operand.vmem [shape: f32[64,1], index: 2, kind: input, shape index: {}]
  %s3 = inlined_call_operand.vmem [shape: f32[32,64], index: 3, kind: input, shape index: {}]
  %s4 = inlined_call_operand.vmem [shape: f32[32,1], index: 4, kind: input, shape index: {}]
  %s5 = inlined_call_operand.vmem [shape: f32[2,32,256], index: 5, kind: output, shape index: {}]
  %s6 = sld [smem:[#allocation0]]
  $region53: #{transition_forward.1} parent=0
    _
  %s8 = ssub.s32 1, %s6
  %s9 = scalar_select 0, %s8, %s6
  loop: start=0, step=1, limit=4
  $region2: #{transition_forward.1} parent=0 // loop_pre_header
    _
  $region3: #{transition_forward.1} parent=0 // loop_header
    %s11 = sphi 0, %s15
    %p12 = scmp.ge.s32.totalorder %s11, 4
    %s18 = sphi 0, %s30
    %s19 = sphi 0, %s26
    %s20 = sphi 0, %s18
    %s21 = sphi 0, %s19
    %s22 = sphi 0, %s20
    %s23 = sphi 0, %s21
    %s35 = sphi 0, %s37
    %s38 = sphi 0, %s35
    %s39 = sphi 0, %s38
    %s55 = sphi 0, %s39
    %s59 = sphi 0, %s59
    %s61 = sphi 0, %s59
    %s62 = sphi 0, %s61
    %s76 = sphi 0, %s62
    %s80 = sphi 0, %s80
    %s82 = sphi 0, %s80
    %s83 = sphi 0, %s82
    %s97 = sphi 0, %s83
    %s101 = sphi 0, %s101
    %s103 = sphi 0, %s101
    %s104 = sphi 0, %s103
    %s118 = sphi 0, %s104
    %s122 = sphi 0, %s122
    %s124 = sphi 0, %s122
    %s125 = sphi 0, %s124
    %s139 = sphi 0, %s125
    %s147 = sphi 0, %s149
    %s150 = sphi 0, %s147
    %s151 = sphi 0, %s150
    %s167 = sphi 0, %s151
  $region4: #{transition_forward.1} parent=0 // loop_header_branch
    %14 = sbr.rel (%p12) target = $region8
  $region5: #{transition_forward.1} parent=0 // loop_body
    %s16 = ssub.s32 %s11, 1
    %s17 = ssub.s32 %s11, 2
    %s24 = sadd.s32 1, %s19
    %p25 = scmp.ge.s32.totalorder %s24, 1
    %s26 = scalar_select %p25, 0, %s24
    %s27 = sadd.s32 1, %s18
    %s28 = scalar_select %p25, %s27, %s18
    %p29 = scmp.ge.s32.totalorder %s28, 2
    %s30 = scalar_select %p29, 0, %s28
    %s31 = ssub.s32 %s18, %s30
    %s32 = ssub.s32 %s19, %s26
    %s33 = sor.u32 %s31, %s32
    %p34 = scmp.eq.s32.totalorder %s33, 0
    %s36 = sadd.s32 %s35, 1
    %s37 = scalar_select %p34, %s35, %s36
    %p40 = pneg %p34
    %p41 = scmp.eq.s32.totalorder %s11, 1
    %p42 = por %p40, %p41
    %p43 = scmp.ne.s32.totalorder %s35, %s38
    %p44 = scmp.eq.s32.totalorder %s11, 0
    %p45 = por %p43, %p44
    %p46 = scmp.ne.s32.totalorder %s35, %s38
    %p47 = scmp.eq.s32.totalorder %s16, 1
    %p48 = por %p46, %p47
    %p49 = scmp.ne.s32.totalorder %s38, %s39
    %p50 = scmp.eq.s32.totalorder %s16, 0
    %p51 = por %p49, %p50
    %p52 = scmp.ne.s32.totalorder %s38, %s39
    %p53 = scmp.eq.s32.totalorder %s17, 1
    %p54 = por %p52, %p53
    %p56 = scmp.ne.s32.totalorder %s39, %s55
    %p57 = scmp.eq.s32.totalorder %s17, 0
    %p58 = por %p56, %p57
    %s60 = sadd.s32 %s59, 1
    %p63 = scmp.eq.s32.totalorder %s11, 1
    %p64 = scmp.ne.s32.totalorder %s59, %s61
    %p65 = scmp.eq.s32.totalorder %s11, 0
    %p66 = por %p64, %p65
    %p67 = scmp.ne.s32.totalorder %s59, %s61
    %p68 = scmp.eq.s32.totalorder %s16, 1
    %p69 = por %p67, %p68
    %p70 = scmp.ne.s32.totalorder %s61, %s62
    %p71 = scmp.eq.s32.totalorder %s16, 0
    %p72 = por %p70, %p71
    %p73 = scmp.ne.s32.totalorder %s61, %s62
    %p74 = scmp.eq.s32.totalorder %s17, 1
    %p75 = por %p73, %p74
    %p77 = scmp.ne.s32.totalorder %s62, %s76
    %p78 = scmp.eq.s32.totalorder %s17, 0
    %p79 = por %p77, %p78
    %s81 = sadd.s32 %s80, 1
    %p84 = scmp.eq.s32.totalorder %s11, 1
    %p85 = scmp.ne.s32.totalorder %s80, %s82
    %p86 = scmp.eq.s32.totalorder %s11, 0
    %p87 = por %p85, %p86
    %p88 = scmp.ne.s32.totalorder %s80, %s82
    %p89 = scmp.eq.s32.totalorder %s16, 1
    %p90 = por %p88, %p89
    %p91 = scmp.ne.s32.totalorder %s82, %s83
    %p92 = scmp.eq.s32.totalorder %s16, 0
    %p93 = por %p91, %p92
    %p94 = scmp.ne.s32.totalorder %s82, %s83
    %p95 = scmp.eq.s32.totalorder %s17, 1
    %p96 = por %p94, %p95
    %p98 = scmp.ne.s32.totalorder %s83, %s97
    %p99 = scmp.eq.s32.totalorder %s17, 0
    %p100 = por %p98, %p99
    %s102 = sadd.s32 %s101, 1
    %p105 = scmp.eq.s32.totalorder %s11, 1
    %p106 = scmp.ne.s32.totalorder %s101, %s103
    %p107 = scmp.eq.s32.totalorder %s11, 0
    %p108 = por %p106, %p107
    %p109 = scmp.ne.s32.totalorder %s101, %s103
    %p110 = scmp.eq.s32.totalorder %s16, 1
    %p111 = por %p109, %p110
    %p112 = scmp.ne.s32.totalorder %s103, %s104
    %p113 = scmp.eq.s32.totalorder %s16, 0
    %p114 = por %p112, %p113
    %p115 = scmp.ne.s32.totalorder %s103, %s104
    %p116 = scmp.eq.s32.totalorder %s17, 1
    %p117 = por %p115, %p116
    %p119 = scmp.ne.s32.totalorder %s104, %s118
    %p120 = scmp.eq.s32.totalorder %s17, 0
    %p121 = por %p119, %p120
    %s123 = sadd.s32 %s122, 1
    %p126 = scmp.eq.s32.totalorder %s11, 1
    %p127 = scmp.ne.s32.totalorder %s122, %s124
    %p128 = scmp.eq.s32.totalorder %s11, 0
    %p129 = por %p127, %p128
    %p130 = scmp.ne.s32.totalorder %s122, %s124
    %p131 = scmp.eq.s32.totalorder %s16, 1
    %p132 = por %p130, %p131
    %p133 = scmp.ne.s32.totalorder %s124, %s125
    %p134 = scmp.eq.s32.totalorder %s16, 0
    %p135 = por %p133, %p134
    %p136 = scmp.ne.s32.totalorder %s124, %s125
    %p137 = scmp.eq.s32.totalorder %s17, 1
    %p138 = por %p136, %p137
    %p140 = scmp.ne.s32.totalorder %s125, %s139
    %p141 = scmp.eq.s32.totalorder %s17, 0
    %p142 = por %p140, %p141
    %s143 = ssub.s32 %s18, %s30
    %s144 = ssub.s32 %s19, %s26
    %s145 = sor.u32 %s143, %s144
    %p146 = scmp.eq.s32.totalorder %s145, 0
    %s148 = sadd.s32 %s147, 1
    %s149 = scalar_select %p146, %s147, %s148
    %p152 = pneg %p146
    %p153 = scmp.eq.s32.totalorder %s11, 1
    %p154 = por %p152, %p153
    %p155 = scmp.ne.s32.totalorder %s147, %s150
    %p156 = scmp.eq.s32.totalorder %s11, 0
    %p157 = por %p155, %p156
    %p158 = scmp.ne.s32.totalorder %s147, %s150
    %p159 = scmp.eq.s32.totalorder %s16, 1
    %p160 = por %p158, %p159
    %p161 = scmp.ne.s32.totalorder %s150, %s151
    %p162 = scmp.eq.s32.totalorder %s16, 0
    %p163 = por %p161, %p162
    %p164 = scmp.ne.s32.totalorder %s150, %s151
    %p165 = scmp.eq.s32.totalorder %s17, 1
    %p166 = por %p164, %p165
    %p168 = scmp.ne.s32.totalorder %s151, %s167
    %p169 = scmp.eq.s32.totalorder %s17, 0
    %p170 = por %p168, %p169
    %p171 = scmp.le.s32.totalorder 1, %s11
    %p172 = scmp.lt.s32.totalorder %s11, 3
    %p173 = pnand %p171, %p172
    %p174 = pneg %p173
    // Predicated region
    $region9: #{transition_forward.1} parent=5 // pred_check
      _
    $region10: #{transition_forward.1} parent=5 // pred_check_branch
      %176 = sbr.rel (%p173) target = $region12
    $region11: #{transition_forward.1} parent=5 // pred_region
      %s177 = ssub.s32 %s11, 1
      // Predicated region
      $region13: #{transition_forward.1} parent=11 // pred_check
        %p178 = pneg %p72
      $region14: #{transition_forward.1} parent=11 // pred_check_branch
        %180 = sbr.rel (%p178) target = $region16
      $region15: #{transition_forward.1} parent=11 // pred_region
        _
      $region16: #{transition_forward.1} parent=11 // pred_fallthru
        _
      // Predicated region
      $region17: #{transition_forward.1} parent=11 // pred_check
        %p181 = pneg %p93
      $region18: #{transition_forward.1} parent=11 // pred_check_branch
        %183 = sbr.rel (%p181) target = $region20
      $region19: #{transition_forward.1} parent=11 // pred_region
        _
      $region20: #{transition_forward.1} parent=11 // pred_fallthru
        _
      // Predicated region
      $region21: #{transition_forward.1} parent=11 // pred_check
        %p184 = pneg %p114
      $region22: #{transition_forward.1} parent=11 // pred_check_branch
        %186 = sbr.rel (%p184) target = $region24
      $region23: #{transition_forward.1} parent=11 // pred_region
        _
      $region24: #{transition_forward.1} parent=11 // pred_fallthru
        _
      // Predicated region
      $region25: #{transition_forward.1} parent=11 // pred_check
        %p187 = pneg %p135
      $region26: #{transition_forward.1} parent=11 // pred_check_branch
        %189 = sbr.rel (%p187) target = $region28
      $region27: #{transition_forward.1} parent=11 // pred_region
        _
      $region28: #{transition_forward.1} parent=11 // pred_fallthru
        _
    $region12: #{transition_forward.1} parent=5 // pred_fallthru
      _
    %p190 = scmp.lt.s32.totalorder %s11, 2
    // Predicated region
    $region29: #{transition_forward.1} parent=5 // pred_check
      %p191 = pneg %p190
    $region30: #{transition_forward.1} parent=5 // pred_check_branch
      %193 = sbr.rel (%p191) target = $region32
    $region31: #{transition_forward.1} parent=5 // pred_region
      // Predicated region
      $region33: #{transition_forward.1} parent=31 // pred_check
        %p194 = pneg %p45
      $region34: #{transition_forward.1} parent=31 // pred_check_branch
        %196 = sbr.rel (%p194) target = $region36
      $region35: #{transition_forward.1} parent=31 // pred_region
        %s197 = smul.u32 2, %s19
        %p198 = scmp.lt.s32.totalorder %s18, 1
        %s199 = scalar_select %p198, %s18, 1
        %p200 = scmp.lt.s32.totalorder %s197, 1
        %s201 = scalar_select %p200, %s197, 1
        %s202 = smul.addr %s199, 16
        %s203 = sadd.s32 %s201, %s202
        %s204 = smul.addr %s203, 8
        %s205 = scalar_lea.vmem %s0, %s204
        %s206 = smul.u32 2, %s19
      $region36: #{transition_forward.1} parent=31 // pred_fallthru
        _
    $region32: #{transition_forward.1} parent=5 // pred_fallthru
      _
    %p207 = scmp.le.s32.totalorder 1, %s11
    %p208 = scmp.lt.s32.totalorder %s11, 3
    %p209 = pnand %p207, %p208
    %p210 = pneg %p209
    // Predicated region
    $region37: #{transition_forward.1} parent=5 // pred_check
      _
    $region38: #{transition_forward.1} parent=5 // pred_check_branch
      %212 = sbr.rel (%p209) target = $region40
    $region39: #{transition_forward.1} parent=5 // pred_region
      %s213 = ssub.s32 %s11, 1
      %s214 = smul.u32 2, %s21
      %p215 = scmp.lt.s32.totalorder %s20, 1
      %s216 = scalar_select %p215, %s20, 1
      %p217 = scmp.lt.s32.totalorder %s214, 1
      %s218 = scalar_select %p217, %s214, 1
      %s219 = smul.addr %s216, 16
      %s220 = sadd.s32 %s218, %s219
      %s221 = smul.addr %s220, 8
      %s222 = scalar_lea.vmem %s0, %s221
      %p223 = pneg %p51
      %p224 = pneg %p48
      %p225 = pneg %p72
      %p226 = pneg %p69
      %p227 = pneg %p93
      %p228 = pneg %p90
      %p229 = pneg %p114
      %p230 = pneg %p111
      %p231 = pneg %p135
      %p232 = pneg %p132
      %p233 = pneg %p163
      %p234 = pneg %p160
      %s235 = smul.u32 2, %s21
      %p236 = scmp.lt.s32.totalorder %s20, 1
      %s237 = scalar_select %p236, %s20, 1
      %p238 = scmp.lt.s32.totalorder %s235, 1
      %s239 = scalar_select %p238, %s235, 1
      %s240 = smul.addr %s237, 8
      %s241 = sadd.s32 %s239, %s240
      %s242 = smul.addr %s241, 8
      %s243 = scalar_lea.vmem %s5, %s242
      %s244 = smul.u32 2, %s21
      %p245 = scmp.lt.s32.totalorder %s20, 1
      %s246 = scalar_select %p245, %s20, 1
      %p247 = scmp.lt.s32.totalorder %s244, 1
      %s248 = scalar_select %p247, %s244, 1
      %s249 = smul.addr %s246, 16
      %s250 = sadd.s32 %s248, %s249
      %s251 = smul.addr %s250, 8
      %s252 = scalar_lea.vmem %s0, %s251
      %s253 = smul.u32 2, %s21
      %s254 = smul.u32 2, %s21
      %p255 = scmp.lt.s32.totalorder %s20, 1
      %s256 = scalar_select %p255, %s20, 1
      %p257 = scmp.lt.s32.totalorder %s254, 1
      %s258 = scalar_select %p257, %s254, 1
      %s259 = smul.addr %s256, 8
      %s260 = sadd.s32 %s258, %s259
      %s261 = smul.addr %s260, 8
      %s262 = scalar_lea.vmem %s5, %s261
      %s263 = smul.u32 2, %s21
      %v264 = vld [vmem:[%s252] sm:$0xff]
      %v265 = vld [vmem:[%s252 + $0x8] sm:$0xff]
      %v266 = vld [vmem:[%s252 + $0x10] sm:$0xff]
      %v267 = vld [vmem:[%s252 + $0x18] sm:$0xff]
      %v268 = vld [vmem:[%s252 + $0x20] sm:$0xff]
      %v269 = vld [vmem:[%s252 + $0x28] sm:$0xff]
      %v270 = vld [vmem:[%s252 + $0x30] sm:$0xff]
      %v271 = vld [vmem:[%s252 + $0x38] sm:$0xff]
      %v272 = vld [vmem:[%s252 + $0x40] sm:$0xff]
      %v273 = vld [vmem:[%s252 + $0x48] sm:$0xff]
      %v274 = vld [vmem:[%s252 + $0x50] sm:$0xff]
      %v275 = vld [vmem:[%s252 + $0x58] sm:$0xff]
      %v276 = vld [vmem:[%s252 + $0x60] sm:$0xff]
      %v277 = vld [vmem:[%s252 + $0x68] sm:$0xff]
      %v278 = vld [vmem:[%s252 + $0x70] sm:$0xff]
      %v279 = vld [vmem:[%s252 + $0x78] sm:$0xff]
      %v280 = vld [vmem:[%s1] sm:$0xff]
      %v281 = vld [vmem:[%s1 + $0x8] sm:$0xff]
      %v282 = vld [vmem:[%s1 + $0x10] sm:$0xff]
      %v283 = vld [vmem:[%s1 + $0x18] sm:$0xff]
      %v284 = vld [vmem:[%s1 + $0x20] sm:$0xff]
      %v285 = vld [vmem:[%s1 + $0x28] sm:$0xff]
      %v286 = vld [vmem:[%s1 + $0x30] sm:$0xff]
      %v287 = vld [vmem:[%s1 + $0x38] sm:$0xff]
      %289 = vset.pattern.permute.xlu0 0
      %290 = vperm.xlu0 %289, %v280
      %v291 = vpop.permute.xlu0 %290
      %294 = vset.pattern.permute.xlu0 0
      %295 = vperm.xlu0 %294, %v281
      %v296 = vpop.permute.xlu0 %295
      %299 = vset.pattern.permute.xlu0 0
      %300 = vperm.xlu0 %299, %v282
      %v301 = vpop.permute.xlu0 %300
      %304 = vset.pattern.permute.xlu0 0
      %305 = vperm.xlu0 %304, %v283
      %v306 = vpop.permute.xlu0 %305
      %309 = vset.pattern.permute.xlu0 0
      %310 = vperm.xlu0 %309, %v284
      %v311 = vpop.permute.xlu0 %310
      %314 = vset.pattern.permute.xlu0 0
      %315 = vperm.xlu0 %314, %v285
      %v316 = vpop.permute.xlu0 %315
      %319 = vset.pattern.permute.xlu0 0
      %320 = vperm.xlu0 %319, %v286
      %v321 = vpop.permute.xlu0 %320
      %324 = vset.pattern.permute.xlu0 0
      %325 = vperm.xlu0 %324, %v287
      %v326 = vpop.permute.xlu0 %325
      %v328 = vmul.f32 %v264, %v291
      %v329 = vmul.f32 %v265, %v291
      %v330 = vmul.f32 %v266, %v296
      %v331 = vmul.f32 %v267, %v296
      %v332 = vmul.f32 %v268, %v301
      %v333 = vmul.f32 %v269, %v301
      %v334 = vmul.f32 %v270, %v306
      %v335 = vmul.f32 %v271, %v306
      %v336 = vmul.f32 %v272, %v311
      %v337 = vmul.f32 %v273, %v311
      %v338 = vmul.f32 %v274, %v316
      %v339 = vmul.f32 %v275, %v316
      %v340 = vmul.f32 %v276, %v321
      %v341 = vmul.f32 %v277, %v321
      %v342 = vmul.f32 %v278, %v326
      %v343 = vmul.f32 %v279, %v326
      %v344 = vld [vmem:[%s2] sm:$0xff]
      %v345 = vld [vmem:[%s2 + $0x8] sm:$0xff]
      %v346 = vld [vmem:[%s2 + $0x10] sm:$0xff]
      %v347 = vld [vmem:[%s2 + $0x18] sm:$0xff]
      %v348 = vld [vmem:[%s2 + $0x20] sm:$0xff]
      %v349 = vld [vmem:[%s2 + $0x28] sm:$0xff]
      %v350 = vld [vmem:[%s2 + $0x30] sm:$0xff]
      %v351 = vld [vmem:[%s2 + $0x38] sm:$0xff]
      %353 = vset.pattern.permute.xlu0 0
      %354 = vperm.xlu0 %353, %v344
      %v355 = vpop.permute.xlu0 %354
      %358 = vset.pattern.permute.xlu0 0
      %359 = vperm.xlu0 %358, %v345
      %v360 = vpop.permute.xlu0 %359
      %363 = vset.pattern.permute.xlu0 0
      %364 = vperm.xlu0 %363, %v346
      %v365 = vpop.permute.xlu0 %364
      %368 = vset.pattern.permute.xlu0 0
      %369 = vperm.xlu0 %368, %v347
      %v370 = vpop.permute.xlu0 %369
      %373 = vset.pattern.permute.xlu0 0
      %374 = vperm.xlu0 %373, %v348
      %v375 = vpop.permute.xlu0 %374
      %378 = vset.pattern.permute.xlu0 0
      %379 = vperm.xlu0 %378, %v349
      %v380 = vpop.permute.xlu0 %379
      %383 = vset.pattern.permute.xlu0 0
      %384 = vperm.xlu0 %383, %v350
      %v385 = vpop.permute.xlu0 %384
      %388 = vset.pattern.permute.xlu0 0
      %389 = vperm.xlu0 %388, %v351
      %v390 = vpop.permute.xlu0 %389
      %v392 = vadd.f32 %v328, %v355
      %v393 = vadd.f32 %v329, %v355
      %v394 = vadd.f32 %v330, %v360
      %v395 = vadd.f32 %v331, %v360
      %v396 = vadd.f32 %v332, %v365
      %v397 = vadd.f32 %v333, %v365
      %v398 = vadd.f32 %v334, %v370
      %v399 = vadd.f32 %v335, %v370
      %v400 = vadd.f32 %v336, %v375
      %v401 = vadd.f32 %v337, %v375
      %v402 = vadd.f32 %v338, %v380
      %v403 = vadd.f32 %v339, %v380
      %v404 = vadd.f32 %v340, %v385
      %v405 = vadd.f32 %v341, %v385
      %v406 = vadd.f32 %v342, %v390
      %v407 = vadd.f32 %v343, %v390
      %v408 = vmax.f32 %v392, 0.0
      %v409 = vmax.f32 %v393, 0.0
      %v410 = vmax.f32 %v394, 0.0
      %v411 = vmax.f32 %v395, 0.0
      %v412 = vmax.f32 %v396, 0.0
      %v413 = vmax.f32 %v397, 0.0
      %v414 = vmax.f32 %v398, 0.0
      %v415 = vmax.f32 %v399, 0.0
      %v416 = vmax.f32 %v400, 0.0
      %v417 = vmax.f32 %v401, 0.0
      %v418 = vmax.f32 %v402, 0.0
      %v419 = vmax.f32 %v403, 0.0
      %v420 = vmax.f32 %v404, 0.0
      %v421 = vmax.f32 %v405, 0.0
      %v422 = vmax.f32 %v406, 0.0
      %v423 = vmax.f32 %v407, 0.0
      %v424 = vld [vmem:[%s3] sm:$0xff]
      %v425 = vld [vmem:[%s3 + $0x8] sm:$0xff]
      %v426 = vld [vmem:[%s3 + $0x10] sm:$0xff]
      %v427 = vld [vmem:[%s3 + $0x18] sm:$0xff]
      %v428 = vld [vmem:[%s4] sm:$0xff]
      %v429 = vld [vmem:[%s4 + $0x8] sm:$0xff]
      %v430 = vld [vmem:[%s4 + $0x10] sm:$0xff]
      %v431 = vld [vmem:[%s4 + $0x18] sm:$0xff]
      %433 = vset.pattern.permute.xlu0 0
      %434 = vperm.xlu0 %433, %v428
      %v435 = vpop.permute.xlu0 %434
      %438 = vset.pattern.permute.xlu0 0
      %439 = vperm.xlu0 %438, %v429
      %v440 = vpop.permute.xlu0 %439
      %443 = vset.pattern.permute.xlu0 0
      %444 = vperm.xlu0 %443, %v430
      %v445 = vpop.permute.xlu0 %444
      %448 = vset.pattern.permute.xlu0 0
      %449 = vperm.xlu0 %448, %v431
      %v450 = vpop.permute.xlu0 %449
      %vm452 = vcmask 523264
      %v454 = vsel %vm452, %v424, 0
      %v457 = vsel %vm452, %v425, 0
      %v460 = vsel %vm452, %v426, 0
      %v463 = vsel %vm452, %v427, 0
      %465 = vmatprep.subr.mxu0 %v409
      %466 = vmatpush1.msra.mxu0 %v408
      %467 = vmatprep.subr.mxu0 %v411
      %468 = vmatpush1.msra.mxu0 %v410
      %469 = vmatprep.subr.mxu0 %v413
      %470 = vmatpush1.msra.mxu0 %v412
      %471 = vmatprep.subr.mxu0 %v415
      %472 = vmatpush1.msra.mxu0 %v414
      %473 = vmatprep.subr.mxu0 %v417
      %474 = vmatpush1.msra.mxu0 %v416
      %475 = vmatprep.subr.mxu0 %v419
      %476 = vmatpush1.msra.mxu0 %v418
      %477 = vmatprep.subr.mxu0 %v421
      %478 = vmatpush1.msra.mxu0 %v420
      %479 = vmatprep.subr.mxu0 %v423
      %480 = vmatpush1.msra.mxu0 %v422
      %481 = vmatprep.subr.mxu0 0.0
      %482 = vmatpush1.msra.mxu0 0.0
      %483 = vmatprep.subr.mxu0 0.0
      %484 = vmatpush1.msra.mxu0 0.0
      %485 = vmatprep.subr.mxu0 0.0
      %486 = vmatpush1.msra.mxu0 0.0
      %487 = vmatprep.subr.mxu0 0.0
      %488 = vmatpush1.msra.mxu0 0.0
      %489 = vmatprep.subr.mxu0 0.0
      %490 = vmatpush1.msra.mxu0 0.0
      %491 = vmatprep.subr.mxu0 0.0
      %492 = vmatpush1.msra.mxu0 0.0
      %493 = vmatprep.subr.mxu0 0.0
      %494 = vmatpush1.msra.mxu0 0.0
      %495 = vmatprep.subr.mxu0 0.0
      %496 = vmatpush1.msra.mxu0 0.0
      %497 = vmatprep.subr.mxu0 0.0
      %498 = vmatpush1.msra.mxu0 0.0
      %499 = vmatprep.subr.mxu0 0.0
      %500 = vmatpush1.msra.mxu0 0.0
      %501 = vmatprep.subr.mxu0 0.0
      %502 = vmatpush1.msra.mxu0 0.0
      %503 = vmatprep.subr.mxu0 0.0
      %504 = vmatpush1.msra.mxu0 0.0
      %505 = vmatprep.subr.mxu0 0.0
      %506 = vmatpush1.msra.mxu0 0.0
      %507 = vmatprep.subr.mxu0 0.0
      %508 = vmatpush1.msra.mxu0 0.0
      %509 = vmatprep.subr.mxu0 0.0
      %510 = vmatpush1.msra.mxu0 0.0
      %511 = vmatprep.subr.mxu0 0.0
      %512 = vmatpush1.msra.mxu0 0.0
      %513 = vmatprep.subr.mxu0 0.0
      %514 = vmatpush1.msra.mxu0 0.0
      %515 = vmatprep.subr.mxu0 0.0
      %516 = vmatpush1.msra.mxu0 0.0
      %517 = vmatprep.subr.mxu0 0.0
      %518 = vmatpush1.msra.mxu0 0.0
      %519 = vmatprep.subr.mxu0 0.0
      %520 = vmatpush1.msra.mxu0 0.0
      %521 = vmatprep.subr.mxu0 0.0
      %522 = vmatpush1.msra.mxu0 0.0
      %523 = vmatprep.subr.mxu0 0.0
      %524 = vmatpush1.msra.mxu0 0.0
      %525 = vmatprep.subr.mxu0 0.0
      %526 = vmatpush1.msra.mxu0 0.0
      %527 = vmatprep.subr.mxu0 0.0
      %528 = vmatpush1.msra.mxu0 0.0
      %529 = vmatprep.mubr.f32.mxu0 0.0
      %530 = vmatmul.mubr.f32.gmra.mrb[0].mxu0 %v454
      %v531 = vpop.f32.mrb[0].mxu0
      %v532 = vadd.f32 %v435, %v531
      %v533 = vpop.f32.mrb[0].mxu0
      %v534 = vadd.f32 %v435, %v533
      %535 = vmatprep.mubr.f32.mxu0 0.0
      %536 = vmatmul.mubr.f32.gmra.mrb[0].mxu0 %v457
      %v537 = vpop.f32.mrb[0].mxu0
      %v538 = vadd.f32 %v440, %v537
      %v539 = vpop.f32.mrb[0].mxu0
      %v540 = vadd.f32 %v440, %v539
      %541 = vmatprep.mubr.f32.mxu0 0.0
      %542 = vmatmul.mubr.f32.gmra.mrb[0].mxu0 %v460
      %v543 = vpop.f32.mrb[0].mxu0
      %v544 = vadd.f32 %v445, %v543
      %v545 = vpop.f32.mrb[0].mxu0
      %v546 = vadd.f32 %v445, %v545
      %547 = vmatprep.mubr.f32.mxu0 0.0
      %548 = vmatmul.mubr.f32.gmra.mrb[0].mxu0 %v463
      %v549 = vpop.f32.mrb[0].mxu0
      %v550 = vadd.f32 %v450, %v549
      %v551 = vpop.f32.mrb[0].mxu0
      %v552 = vadd.f32 %v450, %v551
      %553 = vdwg.mxu0
      %554 = vst [vmem:[%s262] sm:$0xff] %v532
      %555 = vst [vmem:[%s262 + $0x8] sm:$0xff] %v534
      %556 = vst [vmem:[%s262 + $0x10] sm:$0xff] %v538
      %557 = vst [vmem:[%s262 + $0x18] sm:$0xff] %v540
      %558 = vst [vmem:[%s262 + $0x20] sm:$0xff] %v544
      %559 = vst [vmem:[%s262 + $0x28] sm:$0xff] %v546
      %560 = vst [vmem:[%s262 + $0x30] sm:$0xff] %v550
      %561 = vst [vmem:[%s262 + $0x38] sm:$0xff] %v552
      %s562 = smul.u32 2, %s21
      %p563 = scmp.lt.s32.totalorder %s20, 1
      %s564 = scalar_select %p563, %s20, 1
      %p565 = scmp.lt.s32.totalorder %s562, 1
      %s566 = scalar_select %p565, %s562, 1
      %s567 = smul.addr %s564, 8
      %s568 = sadd.s32 %s566, %s567
      %s569 = smul.addr %s568, 8
      %s570 = scalar_lea.vmem %s5, %s569
      // Predicated region
      $region41: #{transition_forward.1} parent=39 // pred_check
        %p571 = pneg %p160
      $region42: #{transition_forward.1} parent=39 // pred_check_branch
        %573 = sbr.rel (%p571) target = $region44
      $region43: #{transition_forward.1} parent=39 // pred_region
        %s574 = smul.u32 2, %s21
      $region44: #{transition_forward.1} parent=39 // pred_fallthru
        _
    $region40: #{transition_forward.1} parent=5 // pred_fallthru
      _
    %p575 = scmp.le.s32.totalorder 2, %s11
    // Predicated region
    $region45: #{transition_forward.1} parent=5 // pred_check
      %p576 = pneg %p575
    $region46: #{transition_forward.1} parent=5 // pred_check_branch
      %578 = sbr.rel (%p576) target = $region48
    $region47: #{transition_forward.1} parent=5 // pred_region
      %s579 = ssub.s32 %s11, 2
      // Predicated region
      $region49: #{transition_forward.1} parent=47 // pred_check
        %p580 = pneg %p166
      $region50: #{transition_forward.1} parent=47 // pred_check_branch
        %582 = sbr.rel (%p580) target = $region52
      $region51: #{transition_forward.1} parent=47 // pred_region
        %s583 = smul.u32 2, %s23
        %p584 = scmp.lt.s32.totalorder %s22, 1
        %s585 = scalar_select %p584, %s22, 1
        %p586 = scmp.lt.s32.totalorder %s583, 1
        %s587 = scalar_select %p586, %s583, 1
        %s588 = smul.addr %s585, 8
        %s589 = sadd.s32 %s587, %s588
        %s590 = smul.addr %s589, 8
        %s591 = scalar_lea.vmem %s5, %s590
      $region52: #{transition_forward.1} parent=47 // pred_fallthru
        _
    $region48: #{transition_forward.1} parent=5 // pred_fallthru
      _
  $region6: #{transition_forward.1} parent=0 // loop_footer
    %s15 = sadd.s32 1, %s11
  $region7: #{transition_forward.1} parent=0 // loop_footer_branch
    %10 = sbr.rel target = $region3
  $region8: #{transition_forward.1} parent=0 // loop_exit
    _

</llo_original>
